<compile_context>
chip_gen: v5e
topology: v5e:2x2
jax: 0.10.0
libtpu: 0.0.40
codegen_flags: <defaults>
</compile_context>

<pallas_src>
import functools

import jax
import jax.numpy as jnp
from jax.experimental import pallas as pl
from jax.experimental.pallas import tpu as pltpu


def _round_up(x, m):
    return ((x + m - 1) // m) * m


def _ffn_kernel(x_ref, w1_ref, b1_ref, w2_ref, b2_ref, o_ref, acc_ref):
    # x_ref:  (row_tile, d_model_p)  bf16
    # w1_ref: (d_model_p, ff_tile)   bf16      b1_ref: (1, ff_tile)   f32
    # w2_ref: (ff_tile, d_model_p)   bf16      b2_ref: (1, d_model_p) f32
    # o_ref:  (row_tile, d_model_p)  f32       acc_ref: f32 scratch
    k = pl.program_id(1)

    @pl.when(k == 0)
    def _init():
        acc_ref[...] = jnp.zeros_like(acc_ref)

    # First matmul on the MXU (bf16 operands, f32 accumulation).
    h = jnp.dot(x_ref[...], w1_ref[...], preferred_element_type=jnp.float32)
    # Bias + ReLU in f32 on the VPU.
    h = jnp.maximum(h + b1_ref[...], 0.0)
    # dropout == identity (inference).
    # Second matmul: accumulate this d_ff slice's contribution in f32.
    acc_ref[...] += jnp.dot(h.astype(jnp.bfloat16), w2_ref[...],
                            preferred_element_type=jnp.float32)

    @pl.when(k == pl.num_programs(1) - 1)
    def _finalize():
        o_ref[...] = (acc_ref[...] + b2_ref[...]).astype(o_ref.dtype)


@functools.partial(jax.jit, static_argnames=("row_tile", "ff_tile"))
def positionwise_feed_forward(x, w1, b1, w2, b2, *, row_tile=512, ff_tile=2048):
    """x: [..., d_model]; w1: (d_model, d_ff); b1: (d_ff,); w2: (d_ff, d_model); b2: (d_model,).

    Weights are pre-transposed to (d_in, d_out) relative to nn.Linear storage.
    """
    orig_shape = x.shape
    d_model = orig_shape[-1]
    d_ff = w1.shape[1]
    rows = 1
    for s in orig_shape[:-1]:
        rows *= s

    # ---- wrapper-side shape plumbing: lane-dense, tile-divisible dims ----
    row_tile = _round_up(min(row_tile, _round_up(rows, 8)), 8)
    rows_p = _round_up(rows, row_tile)
    d_model_p = _round_up(d_model, 128)
    ff_tile = _round_up(min(ff_tile, _round_up(d_ff, 128)), 128)
    d_ff_p = _round_up(d_ff, ff_tile)

    x2 = x.reshape(rows, d_model)
    x2 = jnp.pad(x2, ((0, rows_p - rows), (0, d_model_p - d_model)))
    w1p = jnp.pad(w1, ((0, d_model_p - d_model), (0, d_ff_p - d_ff)))
    b1p = jnp.pad(b1, (0, d_ff_p - d_ff)).reshape(1, d_ff_p).astype(jnp.float32)
    w2p = jnp.pad(w2, ((0, d_ff_p - d_ff), (0, d_model_p - d_model)))
    b2p = jnp.pad(b2, (0, d_model_p - d_model)).reshape(1, d_model_p).astype(jnp.float32)

    # bf16 MXU operands (halves HBM traffic & VMEM); accumulation stays f32.
    x2 = x2.astype(jnp.bfloat16)
    w1p = w1p.astype(jnp.bfloat16)
    w2p = w2p.astype(jnp.bfloat16)

    grid = (rows_p // row_tile, d_ff_p // ff_tile)

    flops = 2 * 2 * rows_p * d_model_p * d_ff_p            # two matmuls
    bytes_accessed = (x2.size * 2 + w1p.size * 2 + w2p.size * 2
                      + b1p.size * 4 + b2p.size * 4
                      + rows_p * d_model_p * jnp.dtype(x.dtype).itemsize)

    out = pl.pallas_call(
        _ffn_kernel,
        out_shape=jax.ShapeDtypeStruct((rows_p, d_model_p), x.dtype),
        grid_spec=pltpu.PrefetchScalarGridSpec(
            num_scalar_prefetch=0,
            grid=grid,
            in_specs=[
                pl.BlockSpec((row_tile, d_model_p), lambda i, k: (i, 0)),   # x tile
                pl.BlockSpec((d_model_p, ff_tile), lambda i, k: (0, k)),    # W1 slice
                pl.BlockSpec((1, ff_tile), lambda i, k: (0, k)),            # b1 slice
                pl.BlockSpec((ff_tile, d_model_p), lambda i, k: (k, 0)),    # W2 slice
                pl.BlockSpec((1, d_model_p), lambda i, k: (0, 0)),          # b2
            ],
            out_specs=pl.BlockSpec((row_tile, d_model_p), lambda i, k: (i, 0)),
            scratch_shapes=[pltpu.VMEM((row_tile, d_model_p), jnp.float32)],
        ),
        compiler_params=pltpu.CompilerParams(
            dimension_semantics=("parallel", "arbitrary"),
            vmem_limit_bytes=64 << 20),
        cost_estimate=pl.CostEstimate(
            flops=flops, transcendentals=0, bytes_accessed=bytes_accessed),
    )(x2, w1p, b1p, w2p, b2p)

    out = out[:rows, :d_model]
    return out.reshape(orig_shape)


def _reference(x, w1, b1, w2, b2):
    """Pure-JAX reference mirroring the kernel's mixed precision (bf16 MXU, f32 acc)."""
    h = jnp.einsum("...m,mf->...f", x.astype(jnp.bfloat16), w1.astype(jnp.bfloat16),
                   preferred_element_type=jnp.float32) + b1
    h = jnp.maximum(h, 0.0).astype(jnp.bfloat16)
    return jnp.einsum("...f,fm->...m", h, w2.astype(jnp.bfloat16),
                      preferred_element_type=jnp.float32) + b2


def _make_params(key, d_model, d_ff):
    k1, kb1, k2, kb2 = jax.random.split(key, 4)
    lim1 = 1.0 / (d_model ** 0.5)
    w1 = jax.random.uniform(k1, (d_model, d_ff), jnp.float32, -lim1, lim1)
    b1 = jax.random.uniform(kb1, (d_ff,), jnp.float32, -lim1, lim1)
    lim2 = 1.0 / (d_ff ** 0.5)
    w2 = jax.random.uniform(k2, (d_ff, d_model), jnp.float32, -lim2, lim2)
    b2 = jax.random.uniform(kb2, (d_model,), jnp.float32, -lim2, lim2)
    return w1, b1, w2, b2


if __name__ == "__main__":
    key = jax.random.PRNGKey(0)
    kx1, kp1, kx2, kp2 = jax.random.split(key, 4)

    # Test 1: small, lane-dense transformer-FFN shapes.
    batch, seq, d_model, d_ff = 2, 8, 128, 256
    x = jax.random.normal(kx1, (batch, seq, d_model), dtype=jnp.float32)
    w1, b1, w2, b2 = _make_params(kp1, d_model, d_ff)

    y = positionwise_feed_forward(x, w1, b1, w2, b2)
    y = jax.block_until_ready(y)
    y_ref = _reference(x, w1, b1, w2, b2)
    assert y.shape == x.shape
    assert jnp.allclose(y, y_ref, atol=1e-3, rtol=1e-3), "mismatch vs reference (test 1)"

    # Test 2: ragged / non-128 dims exercise the wrapper-side padding paths.
    batch2, seq2, d_model2, d_ff2 = 3, 5, 96, 200
    x2 = jax.random.normal(kx2, (batch2, seq2, d_model2), dtype=jnp.float32)
    w1b, b1b, w2b, b2b = _make_params(kp2, d_model2, d_ff2)

    y2 = positionwise_feed_forward(x2, w1b, b1b, w2b, b2b)
    y2 = jax.block_until_ready(y2)
    y2_ref = _reference(x2, w1b, b1b, w2b, b2b)
    assert y2.shape == x2.shape
    assert jnp.allclose(y2, y2_ref, atol=1e-3, rtol=1e-3), "mismatch vs reference (test 2)"

    print("KERNEL_OK")
</pallas_src>

<mosaic_0001>
module attributes {stable_mosaic.version = 11 : i64} {
  func.func @_ffn_kernel(%arg0: i32, %arg1: i32, %arg2: memref<16x128xbf16, #tpu.memory_space<vmem>>, %arg3: memref<128x256xbf16, #tpu.memory_space<vmem>>, %arg4: memref<1x256xf32, #tpu.memory_space<vmem>>, %arg5: memref<256x128xbf16, #tpu.memory_space<vmem>>, %arg6: memref<1x128xf32, #tpu.memory_space<vmem>>, %arg7: memref<16x128xf32, #tpu.memory_space<vmem>>, %arg8: memref<16x128xf32, #tpu.memory_space<vmem>>) attributes {dimension_semantics = [#tpu.dimension_semantics<parallel>, #tpu.dimension_semantics<arbitrary>], iteration_bounds = array<i64: 1, 1>, scalar_prefetch = 0 : i64, scratch_operands = 1 : i64, tpu.core_type = #tpu.core_type<tc>, window_params = [{transform_indices = @transform_0, window_bounds = array<i64: 16, 128>}, {transform_indices = @transform_1, window_bounds = array<i64: 128, 256>}, {transform_indices = @transform_2, window_bounds = array<i64: 1, 256>}, {transform_indices = @transform_3, window_bounds = array<i64: 256, 128>}, {pipeline_mode = #tpu.pipeline_mode<synchronous>, transform_indices = @transform_4, window_bounds = array<i64: 1, 128>}, {transform_indices = @transform_5, window_bounds = array<i64: 16, 128>}]} {
    %c0_i32 = arith.constant 0 : i32
    %0 = arith.cmpi eq, %arg1, %c0_i32 : i32
    %1 = arith.extui %0 : i1 to i32
    %c0_i32_0 = arith.constant 0 : i32
    %2 = arith.cmpi ne, %1, %c0_i32_0 : i32
    scf.if %2 {
      %cst_16 = arith.constant 0.000000e+00 : f32
      %20 = vector.broadcast %cst_16 : f32 to vector<16x128xf32>
      %c0_17 = arith.constant 0 : index
      %c0_18 = arith.constant 0 : index
      %21 = vector.load %arg8[%c0_17, %c0_18] : memref<16x128xf32, #tpu.memory_space<vmem>>, vector<16x128xf32>
      tpu.vector_store %arg8[%c0_17, %c0_18], %20 {strides = array<i32>} : memref<16x128xf32, #tpu.memory_space<vmem>>, vector<16x128xf32>,
    } else {
    }
    %c0 = arith.constant 0 : index
    %c0_1 = arith.constant 0 : index
    %3 = vector.load %arg2[%c0, %c0_1] : memref<16x128xbf16, #tpu.memory_space<vmem>>, vector<16x128xbf16>
    %c0_2 = arith.constant 0 : index
    %c0_3 = arith.constant 0 : index
    %4 = vector.load %arg3[%c0_2, %c0_3] : memref<128x256xbf16, #tpu.memory_space<vmem>>, vector<128x256xbf16>
    %cst = arith.constant dense<0.000000e+00> : vector<16x256xf32>
    %5 = tpu.matmul %3, %4, %cst {dimension_numbers = #tpu.dot_dimension_numbers<[1], [0], [0], [1], [0, 0, 1, 1], [], []>} : vector<16x128xbf16>, vector<128x256xbf16>, vector<16x256xf32> -> vector<16x256xf32>
    %c0_4 = arith.constant 0 : index
    %c0_5 = arith.constant 0 : index
    %6 = vector.load %arg4[%c0_4, %c0_5] : memref<1x256xf32, #tpu.memory_space<vmem>>, vector<1x256xf32>
    %7 = vector.broadcast %6 : vector<1x256xf32> to vector<16x256xf32>
    %8 = arith.addf %5, %7 : vector<16x256xf32>
    %cst_6 = arith.constant 0.000000e+00 : f32
    %9 = vector.broadcast %cst_6 : f32 to vector<16x256xf32>
    %10 = arith.maximumf %8, %9 : vector<16x256xf32>
    %c0_7 = arith.constant 0 : index
    %c0_8 = arith.constant 0 : index
    %11 = vector.load %arg8[%c0_7, %c0_8] : memref<16x128xf32, #tpu.memory_space<vmem>>, vector<16x128xf32>
    %12 = arith.truncf %10 : vector<16x256xf32> to vector<16x256xbf16>
    %c0_9 = arith.constant 0 : index
    %c0_10 = arith.constant 0 : index
    %13 = vector.load %arg5[%c0_9, %c0_10] : memref<256x128xbf16, #tpu.memory_space<vmem>>, vector<256x128xbf16>
    %cst_11 = arith.constant dense<0.000000e+00> : vector<16x128xf32>
    %14 = tpu.matmul %12, %13, %cst_11 {dimension_numbers = #tpu.dot_dimension_numbers<[1], [0], [0], [1], [0, 0, 1, 1], [], []>} : vector<16x256xbf16>, vector<256x128xbf16>, vector<16x128xf32> -> vector<16x128xf32>
    %15 = arith.addf %11, %14 : vector<16x128xf32>
    %c0_12 = arith.constant 0 : index
    %c0_13 = arith.constant 0 : index
    %16 = vector.load %arg8[%c0_12, %c0_13] : memref<16x128xf32, #tpu.memory_space<vmem>>, vector<16x128xf32>
    tpu.vector_store %arg8[%c0_12, %c0_13], %15 {strides = array<i32>} : memref<16x128xf32, #tpu.memory_space<vmem>>, vector<16x128xf32>,
    %c0_i32_14 = arith.constant 0 : i32
    %17 = arith.cmpi eq, %arg1, %c0_i32_14 : i32
    %18 = arith.extui %17 : i1 to i32
    %c0_i32_15 = arith.constant 0 : i32
    %19 = arith.cmpi ne, %18, %c0_i32_15 : i32
    scf.if %19 {
      %c0_16 = arith.constant 0 : index
      %c0_17 = arith.constant 0 : index
      %20 = vector.load %arg8[%c0_16, %c0_17] : memref<16x128xf32, #tpu.memory_space<vmem>>, vector<16x128xf32>
      %c0_18 = arith.constant 0 : index
      %c0_19 = arith.constant 0 : index
      %21 = vector.load %arg6[%c0_18, %c0_19] : memref<1x128xf32, #tpu.memory_space<vmem>>, vector<1x128xf32>
      %22 = vector.broadcast %21 : vector<1x128xf32> to vector<16x128xf32>
      %23 = arith.addf %20, %22 : vector<16x128xf32>
      %c0_20 = arith.constant 0 : index
      %c0_21 = arith.constant 0 : index
      %24 = vector.load %arg7[%c0_20, %c0_21] : memref<16x128xf32, #tpu.memory_space<vmem>>, vector<16x128xf32>
      tpu.vector_store %arg7[%c0_20, %c0_21], %23 {strides = array<i32>} : memref<16x128xf32, #tpu.memory_space<vmem>>, vector<16x128xf32>,
    } else {
    }
    return
  }
  func.func @transform_0(%arg0: i32, %arg1: i32) -> (i32, i32) {
    %c0_i32 = arith.constant 0 : i32
    %c0_i32_0 = arith.constant 0 : i32
    return %arg0, %c0_i32 : i32, i32
  }
  func.func @transform_1(%arg0: i32, %arg1: i32) -> (i32, i32) {
    %c0_i32 = arith.constant 0 : i32
    %c0_i32_0 = arith.constant 0 : i32
    return %c0_i32, %arg1 : i32, i32
  }
  func.func @transform_2(%arg0: i32, %arg1: i32) -> (i32, i32) {
    %c0_i32 = arith.constant 0 : i32
    %c0_i32_0 = arith.constant 0 : i32
    return %c0_i32, %arg1 : i32, i32
  }
  func.func @transform_3(%arg0: i32, %arg1: i32) -> (i32, i32) {
    %c0_i32 = arith.constant 0 : i32
    %c0_i32_0 = arith.constant 0 : i32
    return %arg1, %c0_i32 : i32, i32
  }
  func.func @transform_4(%arg0: i32, %arg1: i32) -> (i32, i32) {
    %c0_i32 = arith.constant 0 : i32
    %c0_i32_0 = arith.constant 0 : i32
    %c0_i32_1 = arith.constant 0 : i32
    return %c0_i32, %c0_i32_0 : i32, i32
  }
  func.func @transform_5(%arg0: i32, %arg1: i32) -> (i32, i32) {
    %c0_i32 = arith.constant 0 : i32
    %c0_i32_0 = arith.constant 0 : i32
    return %arg0, %c0_i32 : i32, i32
  }
}

</mosaic_0001>

<llo_original>
// kernel: positionwise_feed_forward.1
$region0: #{positionwise_feed_forward.1}
  #allocation0 [shape = 'u32[]', space=smem, size = 0x4, offset = 0x4, fixed_abs, tag = 'smem constant byte address 0x4 - core index']
  #allocation1 [shape = 'u32[72,128]{1,0:T(1,128)}', space=vmem, size = 0x9000, scoped, tag = 'internal scratch']
  #allocation2 [shape = 'f32[16,128]{1,0:T(8,128)}', space=vmem, size = 0x2000, scoped, tag = 'scratch operand']
  %s0 = inlined_call_operand.vmem [shape: bf16[16,128], index: 0, kind: input, shape index: {}]
  %s1 = inlined_call_operand.vmem [shape: bf16[128,256], index: 1, kind: input, shape index: {}]
  %s2 = inlined_call_operand.vmem [shape: f32[1,256], index: 2, kind: input, shape index: {}]
  %s3 = inlined_call_operand.vmem [shape: bf16[256,128], index: 3, kind: input, shape index: {}]
  %s4 = inlined_call_operand.vmem [shape: f32[1,128], index: 4, kind: input, shape index: {}]
  %s5 = inlined_call_operand.hbm [shape: f32[16,128], index: 5, kind: output, shape index: {}]
  %s6 = sld [smem:[#allocation0]]
  $region38: #{positionwise_feed_forward.1} parent=0
    _
  %s8 = ssub.s32 1, %s6
  %s9 = scalar_select 0, %s8, %s6
  $region1: #{positionwise_feed_forward.1} parent=0
    #allocation3 [shape = 'u8[8192]{0}', space=vmem, size = 0x2000, scoped, tag = 'output window, operand 0, single buffered']
    #allocation4 [shape = 's32[1]{0}', space=sflag, size = 0x4, scoped, tag = 'scoped memory for positionwise_feed_forward.1']
    %10 = vsyncpa [#allocation4], 0
    // Predicated region
    $region2: #{positionwise_feed_forward.1} parent=1 // pred_check
      _
    $region3: #{positionwise_feed_forward.1} parent=1 // pred_check_branch
      %12 = sbr.rel (0) target = $region5
    $region4: #{positionwise_feed_forward.1} parent=1 // pred_region
      _
    $region5: #{positionwise_feed_forward.1} parent=1 // pred_fallthru
      _
    // Predicated region
    $region6: #{positionwise_feed_forward.1} parent=1 // pred_check
      _
    $region7: #{positionwise_feed_forward.1} parent=1 // pred_check_branch
      %14 = sbr.rel (0) target = $region9
    $region8: #{positionwise_feed_forward.1} parent=1 // pred_region
      _
    $region9: #{positionwise_feed_forward.1} parent=1 // pred_fallthru
      _
    // Predicated region
    $region10: #{positionwise_feed_forward.1} parent=1 // pred_check
      _
    $region11: #{positionwise_feed_forward.1} parent=1 // pred_check_branch
      %16 = sbr.rel (0) target = $region13
    $region12: #{positionwise_feed_forward.1} parent=1 // pred_region
      _
    $region13: #{positionwise_feed_forward.1} parent=1 // pred_fallthru
      _
    // Predicated region
    $region14: #{positionwise_feed_forward.1} parent=1 // pred_check
      _
    $region15: #{positionwise_feed_forward.1} parent=1 // pred_check_branch
      %18 = sbr.rel (0) target = $region17
    $region16: #{positionwise_feed_forward.1} parent=1 // pred_region
      _
    $region17: #{positionwise_feed_forward.1} parent=1 // pred_fallthru
      _
    // Predicated region
    $region18: #{positionwise_feed_forward.1} parent=1 // pred_check
      _
    $region19: #{positionwise_feed_forward.1} parent=1 // pred_check_branch
      %20 = sbr.rel (0) target = $region21
    $region20: #{positionwise_feed_forward.1} parent=1 // pred_region
      _
    $region21: #{positionwise_feed_forward.1} parent=1 // pred_fallthru
      _
    %p21 = scmp.eq.s32.totalorder 0, 0
    // Predicated region
    $region22: #{positionwise_feed_forward.1} parent=1 // pred_check
      %p22 = pneg %p21
    $region23: #{positionwise_feed_forward.1} parent=1 // pred_check_branch
      %24 = sbr.rel (%p22) target = $region25
    $region24: #{positionwise_feed_forward.1} parent=1 // pred_region
      %25 = vst [vmem:[#allocation2] sm:$0xff] 0.0
      %26 = vst [vmem:[#allocation2 + $0x8] sm:$0xff] 0.0
    $region25: #{positionwise_feed_forward.1} parent=1 // pred_fallthru
      _
    %v27 = vld [vmem:[%s0] sm:$0xf]
    %v28 = vld [vmem:[%s0 + $0x4] sm:$0xf]
    %v29 = vld [vmem:[%s1] sm:$0xff]
    %v30 = vld [vmem:[%s1 + $0x8] sm:$0xff]
    %v31 = vld [vmem:[%s1 + $0x10] sm:$0xff]
    %v32 = vld [vmem:[%s1 + $0x18] sm:$0xff]
    %v33 = vld [vmem:[%s1 + $0x20] sm:$0xff]
    %v34 = vld [vmem:[%s1 + $0x28] sm:$0xff]
    %v35 = vld [vmem:[%s1 + $0x30] sm:$0xff]
    %v36 = vld [vmem:[%s1 + $0x38] sm:$0xff]
    %v37 = vld [vmem:[%s1 + $0x40] sm:$0xff]
    %v38 = vld [vmem:[%s1 + $0x48] sm:$0xff]
    %v39 = vld [vmem:[%s1 + $0x50] sm:$0xff]
    %v40 = vld [vmem:[%s1 + $0x58] sm:$0xff]
    %v41 = vld [vmem:[%s1 + $0x60] sm:$0xff]
    %v42 = vld [vmem:[%s1 + $0x68] sm:$0xff]
    %v43 = vld [vmem:[%s1 + $0x70] sm:$0xff]
    %v44 = vld [vmem:[%s1 + $0x78] sm:$0xff]
    %v45 = vld [vmem:[%s2] sm:$0x3]
    %v47 = vperm.slane %v45, 0
    %v48 = vperm.slane %v45, 1
    %v53 = vunpack.c.l.b16 %v27
    %v54 = vunpack.c.l.b16 %v28
    %v55 = vpack.c.b16 %v54, %v53
    %v73 = vunpack.c.l.b16 %v29
    %v74 = vunpack.c.h.b16 %v29
    %v75 = vunpack.c.l.b16 %v30
    %v76 = vunpack.c.h.b16 %v30
    %v77 = vunpack.c.l.b16 %v31
    %v78 = vunpack.c.h.b16 %v31
    %v79 = vunpack.c.l.b16 %v32
    %v80 = vunpack.c.h.b16 %v32
    %v81 = vunpack.c.l.b16 %v33
    %v82 = vunpack.c.h.b16 %v33
    %v83 = vunpack.c.l.b16 %v34
    %v84 = vunpack.c.h.b16 %v34
    %v85 = vunpack.c.l.b16 %v35
    %v86 = vunpack.c.h.b16 %v35
    %v87 = vunpack.c.l.b16 %v36
    %v88 = vunpack.c.h.b16 %v36
    %v89 = vunpack.c.l.b16 %v37
    %v90 = vunpack.c.h.b16 %v37
    %v91 = vunpack.c.l.b16 %v38
    %v92 = vunpack.c.h.b16 %v38
    %v93 = vunpack.c.l.b16 %v39
    %v94 = vunpack.c.h.b16 %v39
    %v95 = vunpack.c.l.b16 %v40
    %v96 = vunpack.c.h.b16 %v40
    %v97 = vunpack.c.l.b16 %v41
    %v98 = vunpack.c.h.b16 %v41
    %v99 = vunpack.c.l.b16 %v42
    %v100 = vunpack.c.h.b16 %v42
    %v101 = vunpack.c.l.b16 %v43
    %v102 = vunpack.c.h.b16 %v43
    %v103 = vunpack.c.l.b16 %v44
    %v104 = vunpack.c.h.b16 %v44
    %v105 = vpack.c.b16 %v75, %v73
    %v106 = vpack.c.b16 %v76, %v74
    %v107 = vpack.c.b16 %v79, %v77
    %v108 = vpack.c.b16 %v80, %v78
    %v109 = vpack.c.b16 %v83, %v81
    %v110 = vpack.c.b16 %v84, %v82
    %v111 = vpack.c.b16 %v87, %v85
    %v112 = vpack.c.b16 %v88, %v86
    %v113 = vpack.c.b16 %v91, %v89
    %v114 = vpack.c.b16 %v92, %v90
    %v115 = vpack.c.b16 %v95, %v93
    %v116 = vpack.c.b16 %v96, %v94
    %v117 = vpack.c.b16 %v99, %v97
    %v118 = vpack.c.b16 %v100, %v98
    %v119 = vpack.c.b16 %v103, %v101
    %v120 = vpack.c.b16 %v104, %v102
    %137 = vmatpush.bf16.msra.mxu0 %v119
    %138 = vmatpush.bf16.msra.mxu0 %v117
    %139 = vmatpush.bf16.msra.mxu0 %v115
    %140 = vmatpush.bf16.msra.mxu0 %v113
    %141 = vmatpush.bf16.msra.mxu0 %v111
    %142 = vmatpush.bf16.msra.mxu0 %v109
    %143 = vmatpush.bf16.msra.mxu0 %v107
    %144 = vmatpush.bf16.msra.mxu0 %v105
    %145 = vmatmul.bf16.gmra.mxu0 %v55
    %v146 = vpop.f32.mrf.mxu0
    %v147 = vadd.f32 %v47, %v146
    %v148 = vpop.f32.mrf.mxu0
    %v149 = vadd.f32 %v47, %v148
    %150 = vdwg.mxu0
    %151 = vmatpush.bf16.msra.mxu0 %v120
    %152 = vmatpush.bf16.msra.mxu0 %v118
    %153 = vmatpush.bf16.msra.mxu0 %v116
    %154 = vmatpush.bf16.msra.mxu0 %v114
    %155 = vmatpush.bf16.msra.mxu0 %v112
    %156 = vmatpush.bf16.msra.mxu0 %v110
    %157 = vmatpush.bf16.msra.mxu0 %v108
    %158 = vmatpush.bf16.msra.mxu0 %v106
    %159 = vmatmul.bf16.gmra.mxu0 %v55
    %v160 = vpop.f32.mrf.mxu0
    %v161 = vadd.f32 %v48, %v160
    %v162 = vpop.f32.mrf.mxu0
    %v163 = vadd.f32 %v48, %v162
    %164 = vdwg.mxu0
    %v165 = vmax.f32 %v147, 0.0
    %v166 = vmax.f32 %v161, 0.0
    %v167 = vmax.f32 %v149, 0.0
    %v168 = vmax.f32 %v163, 0.0
    %v169 = vld [vmem:[#allocation2] sm:$0xff]
    %v170 = vld [vmem:[#allocation2 + $0x8] sm:$0xff]
    %v171 = vpack.c.bf16 %v167, %v165
    %v172 = vpack.c.bf16 %v168, %v166
    %v173 = vld [vmem:[%s3] sm:$0xf]
    %v174 = vld [vmem:[%s3 + $0x4] sm:$0xf]
    %v175 = vld [vmem:[%s3 + $0x8] sm:$0xf]
    %v176 = vld [vmem:[%s3 + $0xc] sm:$0xf]
    %v177 = vld [vmem:[%s3 + $0x10] sm:$0xf]
    %v178 = vld [vmem:[%s3 + $0x14] sm:$0xf]
    %v179 = vld [vmem:[%s3 + $0x18] sm:$0xf]
    %v180 = vld [vmem:[%s3 + $0x1c] sm:$0xf]
    %v181 = vld [vmem:[%s3 + $0x20] sm:$0xf]
    %v182 = vld [vmem:[%s3 + $0x24] sm:$0xf]
    %v183 = vld [vmem:[%s3 + $0x28] sm:$0xf]
    %v184 = vld [vmem:[%s3 + $0x2c] sm:$0xf]
    %v185 = vld [vmem:[%s3 + $0x30] sm:$0xf]
    %v186 = vld [vmem:[%s3 + $0x34] sm:$0xf]
    %v187 = vld [vmem:[%s3 + $0x38] sm:$0xf]
    %v188 = vld [vmem:[%s3 + $0x3c] sm:$0xf]
    %v189 = vld [vmem:[%s3 + $0x40] sm:$0xf]
    %v190 = vld [vmem:[%s3 + $0x44] sm:$0xf]
    %v191 = vld [vmem:[%s3 + $0x48] sm:$0xf]
    %v192 = vld [vmem:[%s3 + $0x4c] sm:$0xf]
    %v193 = vld [vmem:[%s3 + $0x50] sm:$0xf]
    %v194 = vld [vmem:[%s3 + $0x54] sm:$0xf]
    %v195 = vld [vmem:[%s3 + $0x58] sm:$0xf]
    %v196 = vld [vmem:[%s3 + $0x5c] sm:$0xf]
    %v197 = vld [vmem:[%s3 + $0x60] sm:$0xf]
    %v198 = vld [vmem:[%s3 + $0x64] sm:$0xf]
    %v199 = vld [vmem:[%s3 + $0x68] sm:$0xf]
    %v200 = vld [vmem:[%s3 + $0x6c] sm:$0xf]
    %v201 = vld [vmem:[%s3 + $0x70] sm:$0xf]
    %v202 = vld [vmem:[%s3 + $0x74] sm:$0xf]
    %v203 = vld [vmem:[%s3 + $0x78] sm:$0xf]
    %v204 = vld [vmem:[%s3 + $0x7c] sm:$0xf]
    %v237 = vunpack.c.l.b16 %v173
    %v238 = vunpack.c.l.b16 %v174
    %v239 = vunpack.c.l.b16 %v175
    %v240 = vunpack.c.l.b16 %v176
    %v241 = vunpack.c.l.b16 %v177
    %v242 = vunpack.c.l.b16 %v178
    %v243 = vunpack.c.l.b16 %v179
    %v244 = vunpack.c.l.b16 %v180
    %v245 = vunpack.c.l.b16 %v181
    %v246 = vunpack.c.l.b16 %v182
    %v247 = vunpack.c.l.b16 %v183
    %v248 = vunpack.c.l.b16 %v184
    %v249 = vunpack.c.l.b16 %v185
    %v250 = vunpack.c.l.b16 %v186
    %v251 = vunpack.c.l.b16 %v187
    %v252 = vunpack.c.l.b16 %v188
    %v253 = vunpack.c.l.b16 %v189
    %v254 = vunpack.c.l.b16 %v190
    %v255 = vunpack.c.l.b16 %v191
    %v256 = vunpack.c.l.b16 %v192
    %v257 = vunpack.c.l.b16 %v193
    %v258 = vunpack.c.l.b16 %v194
    %v259 = vunpack.c.l.b16 %v195
    %v260 = vunpack.c.l.b16 %v196
    %v261 = vunpack.c.l.b16 %v197
    %v262 = vunpack.c.l.b16 %v198
    %v263 = vunpack.c.l.b16 %v199
    %v264 = vunpack.c.l.b16 %v200
    %v265 = vunpack.c.l.b16 %v201
    %v266 = vunpack.c.l.b16 %v202
    %v267 = vunpack.c.l.b16 %v203
    %v268 = vunpack.c.l.b16 %v204
    %v269 = vpack.c.b16 %v238, %v237
    %v270 = vpack.c.b16 %v240, %v239
    %v271 = vpack.c.b16 %v242, %v241
    %v272 = vpack.c.b16 %v244, %v243
    %v273 = vpack.c.b16 %v246, %v245
    %v274 = vpack.c.b16 %v248, %v247
    %v275 = vpack.c.b16 %v250, %v249
    %v276 = vpack.c.b16 %v252, %v251
    %v277 = vpack.c.b16 %v254, %v253
    %v278 = vpack.c.b16 %v256, %v255
    %v279 = vpack.c.b16 %v258, %v257
    %v280 = vpack.c.b16 %v260, %v259
    %v281 = vpack.c.b16 %v262, %v261
    %v282 = vpack.c.b16 %v264, %v263
    %v283 = vpack.c.b16 %v266, %v265
    %v284 = vpack.c.b16 %v268, %v267
    %301 = vmatpush.bf16.msra.mxu0 %v276
    %302 = vmatpush.bf16.msra.mxu0 %v275
    %303 = vmatpush.bf16.msra.mxu0 %v274
    %304 = vmatpush.bf16.msra.mxu0 %v273
    %305 = vmatpush.bf16.msra.mxu0 %v272
    %306 = vmatpush.bf16.msra.mxu0 %v271
    %307 = vmatpush.bf16.msra.mxu0 %v270
    %308 = vmatpush.bf16.msra.mxu0 %v269
    %309 = vmatmul.bf16.gmra.mxu0 %v171
    %v310 = vpop.f32.mrf.mxu0
    %v311 = vadd.f32 0.0, %v310
    %v312 = vpop.f32.mrf.mxu0
    %v313 = vadd.f32 0.0, %v312
    %314 = vdwg.mxu0
    %315 = vmatpush.bf16.msra.mxu0 %v284
    %316 = vmatpush.bf16.msra.mxu0 %v283
    %317 = vmatpush.bf16.msra.mxu0 %v282
    %318 = vmatpush.bf16.msra.mxu0 %v281
    %319 = vmatpush.bf16.msra.mxu0 %v280
    %320 = vmatpush.bf16.msra.mxu0 %v279
    %321 = vmatpush.bf16.msra.mxu0 %v278
    %322 = vmatpush.bf16.msra.mxu0 %v277
    %323 = vmatmul.bf16.gmra.mxu0 %v172
    %v324 = vpop.f32.mrf.mxu0
    %v325 = vadd.f32 %v311, %v324
    %v326 = vpop.f32.mrf.mxu0
    %v327 = vadd.f32 %v313, %v326
    %328 = vdwg.mxu0
    %v329 = vadd.f32 %v169, %v325
    %v330 = vadd.f32 %v170, %v327
    %331 = vst [vmem:[#allocation2] sm:$0xff] %v329
    %332 = vst [vmem:[#allocation2 + $0x8] sm:$0xff] %v330
    // Predicated region
    $region26: #{positionwise_feed_forward.1} parent=1 // pred_check
      %p333 = pneg %p21
    $region27: #{positionwise_feed_forward.1} parent=1 // pred_check_branch
      %335 = sbr.rel (%p333) target = $region29
    $region28: #{positionwise_feed_forward.1} parent=1 // pred_region
      %v336 = vld [vmem:[#allocation2] sm:$0xff]
      %v337 = vld [vmem:[#allocation2 + $0x8] sm:$0xff]
      %v338 = vld [vmem:[%s4] sm:$0x1]
      %v340 = vperm.slane %v338, 0
      %v342 = vadd.f32 %v336, %v340
      %v343 = vadd.f32 %v337, %v340
      %344 = vst [vmem:[#allocation3] sm:$0xff] %v342
      %345 = vst [vmem:[#allocation3 + $0x8] sm:$0xff] %v343
    $region29: #{positionwise_feed_forward.1} parent=1 // pred_fallthru
      _
    // Predicated region
    $region30: #{positionwise_feed_forward.1} parent=1 // pred_check
      _
    $region31: #{positionwise_feed_forward.1} parent=1 // pred_check_branch
      %347 = sbr.rel (0) target = $region33
    $region32: #{positionwise_feed_forward.1} parent=1 // pred_region
      %349 = vsyncadd [#allocation4], 0
      %s350 = sshll.u32 [#allocation3], 4
      %s351 = int_to_ptr.vmem [resolvable:$true] %s350
      %s352 = sshll.u32 %s5, 4
      %s353 = int_to_ptr.hbm [resolvable:$true] %s352
      %358 = dma.vmem_to_hbm [thread:$0]  %s351, 256, %s353, [#allocation4], 128, 128, 8
    $region33: #{positionwise_feed_forward.1} parent=1 // pred_fallthru
      _
    // Predicated region
    $region34: #{positionwise_feed_forward.1} parent=1 // pred_check
      _
    $region35: #{positionwise_feed_forward.1} parent=1 // pred_check_branch
      %360 = sbr.rel (0) target = $region37
    $region36: #{positionwise_feed_forward.1} parent=1 // pred_region
      %362 = dma.done [#allocation4], 256
    $region37: #{positionwise_feed_forward.1} parent=1 // pred_fallthru
      _
    %363 = vsyncpa [#allocation4], 1

</llo_original>
